<compile_context>
chip_gen: v5e
topology: v5e:2x2
jax: 0.10.0
libtpu: 0.0.40
codegen_flags: <defaults>
</compile_context>

<pallas_src>
import functools

import jax
import jax.numpy as jnp
from jax.experimental import pallas as pl
from jax.experimental.pallas import tpu as pltpu


# ----------------------------------------------------------------------------
# Kernel 1: global average pool (over HW chunks) + squeeze/excite -> s (BC, 1)
# ----------------------------------------------------------------------------
def _pool_excite_kernel(x_ref, w1_ref, b1_ref, w2t_ref, b2_ref, s_ref, acc_ref,
                        *, inv_hw):
    k = pl.program_id(0)
    n_k = pl.num_programs(0)

    C, Cr = w1_ref.shape
    BC = s_ref.shape[0]
    B = BC // C

    @pl.when(k == 0)
    def _init():
        acc_ref[...] = jnp.zeros_like(acc_ref)

    # ---- pool: fold this (BC, hw_tile) chunk onto 128 lanes (pure VPU adds) -
    xc = x_ref[...].astype(jnp.float32)          # (BC, hw_tile)
    n_fold = xc.shape[1] // 128
    psum = xc[:, 0:128]
    for t in range(1, n_fold):
        psum = psum + xc[:, t * 128:(t + 1) * 128]
    acc_ref[...] += psum

    # ---- excite: runs once after the last chunk -----------------------------
    @pl.when(k == n_k - 1)
    def _excite():
        pooled = jnp.sum(acc_ref[...], axis=-1, keepdims=True) * inv_hw  # (BC,1)
        w1 = w1_ref[...]        # (C, Cr)
        b1 = b1_ref[...]        # (1, Cr)
        w2t = w2t_ref[...]      # (C, Cr) == W2.T
        b2 = b2_ref[...]        # (C, 1)
        # Per-sample FCs, exact f32 on the VPU/XLU (contractions are far below
        # MXU tile size), keeping s in column layout throughout.
        # TODO(synk): for large B switch to a segmented-sum (selector matmul)
        # formulation instead of this unrolled per-sample loop.
        for b in range(B):
            p_b = pooled[b * C:(b + 1) * C, :]                        # (C, 1)
            h_b = jnp.sum(p_b * w1, axis=0, keepdims=True) + b1       # (1, Cr)
            h_b = jnp.maximum(h_b, 0.0)
            z_b = jnp.sum(h_b * w2t, axis=1, keepdims=True) + b2      # (C, 1)
            # Numerically stable sigmoid (exp on the EUP; no overflow).
            e = jnp.exp(-jnp.abs(z_b))
            s_b = jnp.where(z_b >= 0.0, 1.0 / (1.0 + e), e / (1.0 + e))
            s_ref[pl.ds(b * C, C), :] = s_b


# ----------------------------------------------------------------------------
# Kernel 2: out[i, j] = s[i] * s[j]  (the module's s.view(B,C,1,1) * s quirk)
# ----------------------------------------------------------------------------
def _outer_kernel(s_col_ref, s_row_ref, o_ref):
    o_ref[...] = (s_col_ref[...] * s_row_ref[...]).astype(o_ref.dtype)


# ----------------------------------------------------------------------------
# Wrapper
# ----------------------------------------------------------------------------
def _round_up(v, m):
    return (v + m - 1) // m * m


def _largest_divisor_tile(extent, quantum, max_tile):
    """Largest multiple of `quantum` that divides `extent` and is <= max_tile;
    falls back to the full extent (always a legal block size)."""
    best = None
    t = quantum
    cap = min(extent, max_tile)
    while t <= cap:
        if extent % t == 0:
            best = t
        t += quantum
    return best if best is not None else extent


def se_block_forward(x, w1, b1, w2, b2):
    """Pallas SEblock forward.  x: (B, C, H, W); returns (B, C, B, C)."""
    B, C, H, W = x.shape
    Cr = w1.shape[1]
    BC, HW = B * C, H * W
    f32 = jnp.float32

    # ---- Pass 1: pool + excite ----------------------------------------------
    # Zero-pad the spatial extent to a lane-dense multiple (zeros don't change
    # the sum; inv_hw below uses the true HW).
    x2 = x.reshape(BC, HW)
    hw_pad = _round_up(HW, 128)
    if hw_pad != HW:
        x2 = jnp.pad(x2, ((0, 0), (0, hw_pad - HW)))
    # Chunk size: largest lane-dense divisor of hw_pad keeping the
    # double-buffered x block ~<= 2 MiB (comfortable on v5e/v6e/v7x).
    hw_tile = 128
    for cand in (2048, 1024, 512, 256, 128):
        if hw_pad % cand == 0 and BC * cand * x2.dtype.itemsize <= 2 * 1024 * 1024:
            hw_tile = cand
            break
    n_k = hw_pad // hw_tile

    w1f = w1.astype(f32)                        # (C, Cr)
    b1f = b1.astype(f32).reshape(1, Cr)         # (1, Cr)
    w2tf = w2.T.astype(f32)                     # (C, Cr)
    b2f = b2.astype(f32).reshape(C, 1)          # (C, 1)

    pool_cost = pl.CostEstimate(
        flops=int(BC * hw_pad + 4 * B * C * Cr + 2 * BC),
        transcendentals=int(BC),
        bytes_accessed=int(BC * hw_pad * x2.dtype.itemsize + BC * 4
                           + 4 * (w1f.size + b1f.size + w2tf.size + b2f.size)),
    )

    s_col = pl.pallas_call(
        functools.partial(_pool_excite_kernel, inv_hw=1.0 / float(HW)),
        out_shape=jax.ShapeDtypeStruct((BC, 1), f32),
        grid_spec=pltpu.PrefetchScalarGridSpec(
            num_scalar_prefetch=0,
            grid=(n_k,),
            in_specs=[
                pl.BlockSpec((BC, hw_tile), lambda k: (0, k)),
                pl.BlockSpec((C, Cr), lambda k: (0, 0)),
                pl.BlockSpec((1, Cr), lambda k: (0, 0)),
                pl.BlockSpec((C, Cr), lambda k: (0, 0)),
                pl.BlockSpec((C, 1), lambda k: (0, 0)),
            ],
            out_specs=pl.BlockSpec((BC, 1), lambda k: (0, 0)),
            scratch_shapes=[pltpu.VMEM((BC, 128), f32)],   # VPU pool accumulator
        ),
        compiler_params=pltpu.CompilerParams(
            dimension_semantics=("arbitrary",),            # HW reduction axis
            vmem_limit_bytes=32 * 1024 * 1024,
        ),
        cost_estimate=pool_cost,
    )(x2, w1f, b1f, w2tf, b2f)

    # ---- Pass 2: outer product s (x) s --------------------------------------
    # s is tiny (BC*4 bytes); presenting it also in lane-dense row layout is a
    # free wrapper reshape, so each output tile is one VPU broadcast multiply
    # + full-lane store and the 2-D grid is fully parallel across TensorCores.
    s_row = s_col.reshape(1, BC)

    tn = _largest_divisor_tile(BC, 128, 1024)                 # lane tile
    tm_budget = max(8, (2 * 1024 * 1024) // (tn * 4))          # ~<= 2 MiB / tile
    tm = _largest_divisor_tile(BC, 8, tm_budget)

    out_dtype = x.dtype
    outer_cost = pl.CostEstimate(
        flops=int(BC * BC),
        transcendentals=0,
        bytes_accessed=int(BC * BC * jnp.dtype(out_dtype).itemsize + 2 * BC * 4),
    )

    out = pl.pallas_call(
        _outer_kernel,
        out_shape=jax.ShapeDtypeStruct((BC, BC), out_dtype),
        grid_spec=pltpu.PrefetchScalarGridSpec(
            num_scalar_prefetch=0,
            grid=(BC // tm, BC // tn),
            in_specs=[
                pl.BlockSpec((tm, 1), lambda i, j: (i, 0)),
                pl.BlockSpec((1, tn), lambda i, j: (0, j)),
            ],
            out_specs=pl.BlockSpec((tm, tn), lambda i, j: (i, j)),
        ),
        compiler_params=pltpu.CompilerParams(
            dimension_semantics=("parallel", "parallel"),
            vmem_limit_bytes=32 * 1024 * 1024,
        ),
        cost_estimate=outer_cost,
    )(s_col, s_row)

    # Pure metadata dim-split; no slice, no extra HBM pass.
    return out.reshape(B, C, B, C)


# ----------------------------------------------------------------------------
# Reference & test harness
# ----------------------------------------------------------------------------
def se_block_reference(x, w1, b1, w2, b2):
    """Pure-JAX reference for the module's exact forward semantics."""
    hi = jax.lax.Precision.HIGHEST
    pooled = jnp.mean(x.astype(jnp.float32), axis=(2, 3))                # (B, C)
    h = jnp.maximum(jnp.dot(pooled, w1, precision=hi) + b1, 0.0)         # (B, Cr)
    s = jax.nn.sigmoid(jnp.dot(h, w2, precision=hi) + b2)                # (B, C)
    return s[:, :, None, None] * s[None, None, :, :]                     # (B,C,B,C)


def _init_linear_params(key, C, Cr):
    k1, k2, k3, k4 = jax.random.split(key, 4)
    bound1 = 1.0 / (C ** 0.5)
    w1 = jax.random.uniform(k1, (C, Cr), jnp.float32, -bound1, bound1)
    b1 = jax.random.uniform(k2, (Cr,), jnp.float32, -bound1, bound1)
    bound2 = 1.0 / (Cr ** 0.5)
    w2 = jax.random.uniform(k3, (Cr, C), jnp.float32, -bound2, bound2)
    b2 = jax.random.uniform(k4, (C,), jnp.float32, -bound2, bound2)
    return w1, b1, w2, b2


if __name__ == "__main__":
    key = jax.random.PRNGKey(0)
    fwd = jax.jit(se_block_forward)

    # Case 1: canonical small shape (single output tile, single HW chunk).
    # Case 2: exercises the multi-chunk HW reduction and a 128-aligned BC.
    cases = [
        dict(B=2, C=32, H=16, W=16, reduction=16),
        dict(B=4, C=160, H=32, W=32, reduction=16),
    ]

    for idx, cfg in enumerate(cases):
        key, kx, kp = jax.random.split(key, 3)
        B, C, H, W = cfg["B"], cfg["C"], cfg["H"], cfg["W"]
        Cr = C // cfg["reduction"]
        x = jax.random.normal(kx, (B, C, H, W), dtype=jnp.float32)
        w1, b1, w2, b2 = _init_linear_params(kp, C, Cr)

        out = jax.block_until_ready(fwd(x, w1, b1, w2, b2))
        ref = se_block_reference(x, w1, b1, w2, b2)

        assert out.shape == (B, C, B, C), (idx, out.shape)
        assert jnp.allclose(out, ref, atol=2e-5, rtol=2e-5), (
            f"case {idx}: max abs err {float(jnp.max(jnp.abs(out - ref))):.3e}")

    print("KERNEL_OK")
</pallas_src>

<mosaic_0001>
module attributes {stable_mosaic.version = 11 : i64} {
  func.func @_pool_excite_kernel(%arg0: i32, %arg1: memref<64x256xf32, #tpu.memory_space<vmem>>, %arg2: memref<32x2xf32, #tpu.memory_space<vmem>>, %arg3: memref<1x2xf32, #tpu.memory_space<vmem>>, %arg4: memref<32x2xf32, #tpu.memory_space<vmem>>, %arg5: memref<32x1xf32, #tpu.memory_space<vmem>>, %arg6: memref<64x1xf32, #tpu.memory_space<vmem>>, %arg7: memref<64x128xf32, #tpu.memory_space<vmem>>) attributes {dimension_semantics = [#tpu.dimension_semantics<arbitrary>], iteration_bounds = array<i64: 1>, scalar_prefetch = 0 : i64, scratch_operands = 1 : i64, tpu.core_type = #tpu.core_type<tc>, window_params = [{transform_indices = @transform_0, window_bounds = array<i64: 64, 256>}, {pipeline_mode = #tpu.pipeline_mode<synchronous>, transform_indices = @transform_1, window_bounds = array<i64: 32, 2>}, {pipeline_mode = #tpu.pipeline_mode<synchronous>, transform_indices = @transform_2, window_bounds = array<i64: 1, 2>}, {pipeline_mode = #tpu.pipeline_mode<synchronous>, transform_indices = @transform_3, window_bounds = array<i64: 32, 2>}, {pipeline_mode = #tpu.pipeline_mode<synchronous>, transform_indices = @transform_4, window_bounds = array<i64: 32, 1>}, {pipeline_mode = #tpu.pipeline_mode<synchronous>, transform_indices = @transform_5, window_bounds = array<i64: 64, 1>}]} {
    %c0_i32 = arith.constant 0 : i32
    %0 = arith.cmpi eq, %arg0, %c0_i32 : i32
    %1 = arith.extui %0 : i1 to i32
    %c0_i32_0 = arith.constant 0 : i32
    %2 = arith.cmpi ne, %1, %c0_i32_0 : i32
    scf.if %2 {
      %cst = arith.constant 0.000000e+00 : f32
      %13 = vector.broadcast %cst : f32 to vector<64x128xf32>
      %c0_8 = arith.constant 0 : index
      %c0_9 = arith.constant 0 : index
      %14 = vector.load %arg7[%c0_8, %c0_9] : memref<64x128xf32, #tpu.memory_space<vmem>>, vector<64x128xf32>
      tpu.vector_store %arg7[%c0_8, %c0_9], %13 {strides = array<i32>} : memref<64x128xf32, #tpu.memory_space<vmem>>, vector<64x128xf32>,
    } else {
    }
    %c0 = arith.constant 0 : index
    %c0_1 = arith.constant 0 : index
    %3 = vector.load %arg1[%c0, %c0_1] : memref<64x256xf32, #tpu.memory_space<vmem>>, vector<64x256xf32>
    %4 = vector.extract_strided_slice %3 {offsets = [0, 0], sizes = [64, 128], strides = [1, 1]} : vector<64x256xf32> to vector<64x128xf32>
    %5 = vector.extract_strided_slice %3 {offsets = [0, 128], sizes = [64, 128], strides = [1, 1]} : vector<64x256xf32> to vector<64x128xf32>
    %6 = arith.addf %4, %5 : vector<64x128xf32>
    %c0_2 = arith.constant 0 : index
    %c0_3 = arith.constant 0 : index
    %7 = vector.load %arg7[%c0_2, %c0_3] : memref<64x128xf32, #tpu.memory_space<vmem>>, vector<64x128xf32>
    %8 = arith.addf %7, %6 : vector<64x128xf32>
    %c0_4 = arith.constant 0 : index
    %c0_5 = arith.constant 0 : index
    %9 = vector.load %arg7[%c0_4, %c0_5] : memref<64x128xf32, #tpu.memory_space<vmem>>, vector<64x128xf32>
    tpu.vector_store %arg7[%c0_4, %c0_5], %8 {strides = array<i32>} : memref<64x128xf32, #tpu.memory_space<vmem>>, vector<64x128xf32>,
    %c0_i32_6 = arith.constant 0 : i32
    %10 = arith.cmpi eq, %arg0, %c0_i32_6 : i32
    %11 = arith.extui %10 : i1 to i32
    %c0_i32_7 = arith.constant 0 : i32
    %12 = arith.cmpi ne, %11, %c0_i32_7 : i32
    scf.if %12 {
      %c0_8 = arith.constant 0 : index
      %c0_9 = arith.constant 0 : index
      %13 = vector.load %arg7[%c0_8, %c0_9] : memref<64x128xf32, #tpu.memory_space<vmem>>, vector<64x128xf32>
      %cst = arith.constant dense<0.000000e+00> : vector<64xf32>
      %14 = vector.multi_reduction <add>, %13, %cst [1] : vector<64x128xf32> to vector<64xf32>
      %15 = vector.shape_cast %14 : vector<64xf32> to vector<64x1xf32>
      %cst_10 = arith.constant 3.906250e-03 : f32
      %16 = vector.broadcast %cst_10 : f32 to vector<64x1xf32>
      %17 = arith.mulf %15, %16 : vector<64x1xf32>
      %c0_11 = arith.constant 0 : index
      %c0_12 = arith.constant 0 : index
      %18 = vector.load %arg2[%c0_11, %c0_12] : memref<32x2xf32, #tpu.memory_space<vmem>>, vector<32x2xf32>
      %c0_13 = arith.constant 0 : index
      %c0_14 = arith.constant 0 : index
      %19 = vector.load %arg3[%c0_13, %c0_14] : memref<1x2xf32, #tpu.memory_space<vmem>>, vector<1x2xf32>
      %c0_15 = arith.constant 0 : index
      %c0_16 = arith.constant 0 : index
      %20 = vector.load %arg4[%c0_15, %c0_16] : memref<32x2xf32, #tpu.memory_space<vmem>>, vector<32x2xf32>
      %c0_17 = arith.constant 0 : index
      %c0_18 = arith.constant 0 : index
      %21 = vector.load %arg5[%c0_17, %c0_18] : memref<32x1xf32, #tpu.memory_space<vmem>>, vector<32x1xf32>
      %22 = vector.extract_strided_slice %17 {offsets = [0, 0], sizes = [32, 1], strides = [1, 1]} : vector<64x1xf32> to vector<32x1xf32>
      %23 = vector.broadcast %22 : vector<32x1xf32> to vector<32x2xf32>
      %24 = arith.mulf %23, %18 : vector<32x2xf32>
      %cst_19 = arith.constant dense<0.000000e+00> : vector<2xf32>
      %25 = vector.multi_reduction <add>, %24, %cst_19 [0] : vector<32x2xf32> to vector<2xf32>
      %26 = vector.shape_cast %25 : vector<2xf32> to vector<1x2xf32>
      %27 = arith.addf %26, %19 : vector<1x2xf32>
      %cst_20 = arith.constant 0.000000e+00 : f32
      %28 = vector.broadcast %cst_20 : f32 to vector<1x2xf32>
      %29 = arith.maximumf %27, %28 : vector<1x2xf32>
      %30 = vector.broadcast %29 : vector<1x2xf32> to vector<32x2xf32>
      %31 = arith.mulf %30, %20 : vector<32x2xf32>
      %cst_21 = arith.constant dense<0.000000e+00> : vector<32xf32>
      %32 = vector.multi_reduction <add>, %31, %cst_21 [1] : vector<32x2xf32> to vector<32xf32>
      %33 = vector.shape_cast %32 : vector<32xf32> to vector<32x1xf32>
      %34 = arith.addf %33, %21 : vector<32x1xf32>
      %35 = math.absf %34 : vector<32x1xf32>
      %cst_22 = arith.constant 0.000000e+00 : f32
      %36 = vector.broadcast %cst_22 : f32 to vector<32x1xf32>
      %37 = arith.subf %36, %35 : vector<32x1xf32>
      %38 = math.exp %37 : vector<32x1xf32>
      %cst_23 = arith.constant 0.000000e+00 : f32
      %39 = vector.broadcast %cst_23 : f32 to vector<32x1xf32>
      %40 = arith.cmpf oge, %34, %39 : vector<32x1xf32>
      %cst_24 = arith.constant 1.000000e+00 : f32
      %41 = vector.broadcast %cst_24 : f32 to vector<32x1xf32>
      %42 = arith.addf %41, %38 : vector<32x1xf32>
      %cst_25 = arith.constant 1.000000e+00 : f32
      %43 = vector.broadcast %cst_25 : f32 to vector<32x1xf32>
      %44 = arith.divf %43, %42 : vector<32x1xf32>
      %cst_26 = arith.constant 1.000000e+00 : f32
      %45 = vector.broadcast %cst_26 : f32 to vector<32x1xf32>
      %46 = arith.addf %45, %38 : vector<32x1xf32>
      %47 = arith.divf %38, %46 : vector<32x1xf32>
      %48 = arith.select %40, %44, %47 : vector<32x1xi1>, vector<32x1xf32>
      %c0_27 = arith.constant 0 : index
      %c0_28 = arith.constant 0 : index
      %49 = vector.load %arg6[%c0_27, %c0_28] : memref<64x1xf32, #tpu.memory_space<vmem>>, vector<32x1xf32>
      tpu.vector_store %arg6[%c0_27, %c0_28], %48 {strides = array<i32>} : memref<64x1xf32, #tpu.memory_space<vmem>>, vector<32x1xf32>,
      %50 = vector.extract_strided_slice %17 {offsets = [32, 0], sizes = [32, 1], strides = [1, 1]} : vector<64x1xf32> to vector<32x1xf32>
      %51 = vector.broadcast %50 : vector<32x1xf32> to vector<32x2xf32>
      %52 = arith.mulf %51, %18 : vector<32x2xf32>
      %cst_29 = arith.constant dense<0.000000e+00> : vector<2xf32>
      %53 = vector.multi_reduction <add>, %52, %cst_29 [0] : vector<32x2xf32> to vector<2xf32>
      %54 = vector.shape_cast %53 : vector<2xf32> to vector<1x2xf32>
      %55 = arith.addf %54, %19 : vector<1x2xf32>
      %cst_30 = arith.constant 0.000000e+00 : f32
      %56 = vector.broadcast %cst_30 : f32 to vector<1x2xf32>
      %57 = arith.maximumf %55, %56 : vector<1x2xf32>
      %58 = vector.broadcast %57 : vector<1x2xf32> to vector<32x2xf32>
      %59 = arith.mulf %58, %20 : vector<32x2xf32>
      %cst_31 = arith.constant dense<0.000000e+00> : vector<32xf32>
      %60 = vector.multi_reduction <add>, %59, %cst_31 [1] : vector<32x2xf32> to vector<32xf32>
      %61 = vector.shape_cast %60 : vector<32xf32> to vector<32x1xf32>
      %62 = arith.addf %61, %21 : vector<32x1xf32>
      %63 = math.absf %62 : vector<32x1xf32>
      %cst_32 = arith.constant 0.000000e+00 : f32
      %64 = vector.broadcast %cst_32 : f32 to vector<32x1xf32>
      %65 = arith.subf %64, %63 : vector<32x1xf32>
      %66 = math.exp %65 : vector<32x1xf32>
      %cst_33 = arith.constant 0.000000e+00 : f32
      %67 = vector.broadcast %cst_33 : f32 to vector<32x1xf32>
      %68 = arith.cmpf oge, %62, %67 : vector<32x1xf32>
      %cst_34 = arith.constant 1.000000e+00 : f32
      %69 = vector.broadcast %cst_34 : f32 to vector<32x1xf32>
      %70 = arith.addf %69, %66 : vector<32x1xf32>
      %cst_35 = arith.constant 1.000000e+00 : f32
      %71 = vector.broadcast %cst_35 : f32 to vector<32x1xf32>
      %72 = arith.divf %71, %70 : vector<32x1xf32>
      %cst_36 = arith.constant 1.000000e+00 : f32
      %73 = vector.broadcast %cst_36 : f32 to vector<32x1xf32>
      %74 = arith.addf %73, %66 : vector<32x1xf32>
      %75 = arith.divf %66, %74 : vector<32x1xf32>
      %76 = arith.select %68, %72, %75 : vector<32x1xi1>, vector<32x1xf32>
      %c32 = arith.constant 32 : index
      %c0_37 = arith.constant 0 : index
      %77 = vector.load %arg6[%c32, %c0_37] : memref<64x1xf32, #tpu.memory_space<vmem>>, vector<32x1xf32>
      tpu.vector_store %arg6[%c32, %c0_37], %76 {strides = array<i32>} : memref<64x1xf32, #tpu.memory_space<vmem>>, vector<32x1xf32>,
    } else {
    }
    return
  }
  func.func @transform_0(%arg0: i32) -> (i32, i32) {
    %c0_i32 = arith.constant 0 : i32
    %c0_i32_0 = arith.constant 0 : i32
    return %c0_i32, %arg0 : i32, i32
  }
  func.func @transform_1(%arg0: i32) -> (i32, i32) {
    %c0_i32 = arith.constant 0 : i32
    %c0_i32_0 = arith.constant 0 : i32
    %c0_i32_1 = arith.constant 0 : i32
    return %c0_i32, %c0_i32_0 : i32, i32
  }
  func.func @transform_2(%arg0: i32) -> (i32, i32) {
    %c0_i32 = arith.constant 0 : i32
    %c0_i32_0 = arith.constant 0 : i32
    %c0_i32_1 = arith.constant 0 : i32
    return %c0_i32, %c0_i32_0 : i32, i32
  }
  func.func @transform_3(%arg0: i32) -> (i32, i32) {
    %c0_i32 = arith.constant 0 : i32
    %c0_i32_0 = arith.constant 0 : i32
    %c0_i32_1 = arith.constant 0 : i32
    return %c0_i32, %c0_i32_0 : i32, i32
  }
  func.func @transform_4(%arg0: i32) -> (i32, i32) {
    %c0_i32 = arith.constant 0 : i32
    %c0_i32_0 = arith.constant 0 : i32
    %c0_i32_1 = arith.constant 0 : i32
    return %c0_i32, %c0_i32_0 : i32, i32
  }
  func.func @transform_5(%arg0: i32) -> (i32, i32) {
    %c0_i32 = arith.constant 0 : i32
    %c0_i32_0 = arith.constant 0 : i32
    %c0_i32_1 = arith.constant 0 : i32
    return %c0_i32, %c0_i32_0 : i32, i32
  }
}

module attributes {stable_mosaic.version = 11 : i64} {
  func.func @_outer_kernel(%arg0: i32, %arg1: i32, %arg2: memref<64x1xf32, #tpu.memory_space<vmem>>, %arg3: memref<1x64xf32, #tpu.memory_space<vmem>>, %arg4: memref<64x64xf32, #tpu.memory_space<vmem>>) attributes {dimension_semantics = [#tpu.dimension_semantics<parallel>, #tpu.dimension_semantics<parallel>], iteration_bounds = array<i64: 1, 1>, scalar_prefetch = 0 : i64, scratch_operands = 0 : i64, tpu.core_type = #tpu.core_type<tc>, window_params = [{transform_indices = @transform_0, window_bounds = array<i64: 64, 1>}, {transform_indices = @transform_1, window_bounds = array<i64: 1, 64>}, {transform_indices = @transform_2, window_bounds = array<i64: 64, 64>}]} {
    %c0 = arith.constant 0 : index
    %c0_0 = arith.constant 0 : index
    %0 = vector.load %arg2[%c0, %c0_0] : memref<64x1xf32, #tpu.memory_space<vmem>>, vector<64x1xf32>
    %c0_1 = arith.constant 0 : index
    %c0_2 = arith.constant 0 : index
    %1 = vector.load %arg3[%c0_1, %c0_2] : memref<1x64xf32, #tpu.memory_space<vmem>>, vector<1x64xf32>
    %2 = vector.broadcast %0 : vector<64x1xf32> to vector<64x64xf32>
    %3 = vector.broadcast %1 : vector<1x64xf32> to vector<64x64xf32>
    %4 = arith.mulf %2, %3 : vector<64x64xf32>
    %c0_3 = arith.constant 0 : index
    %c0_4 = arith.constant 0 : index
    %5 = vector.load %arg4[%c0_3, %c0_4] : memref<64x64xf32, #tpu.memory_space<vmem>>, vector<64x64xf32>
    tpu.vector_store %arg4[%c0_3, %c0_4], %4 {strides = array<i32>} : memref<64x64xf32, #tpu.memory_space<vmem>>, vector<64x64xf32>,
    return
  }
  func.func @transform_0(%arg0: i32, %arg1: i32) -> (i32, i32) {
    %c0_i32 = arith.constant 0 : i32
    %c0_i32_0 = arith.constant 0 : i32
    return %arg0, %c0_i32 : i32, i32
  }
  func.func @transform_1(%arg0: i32, %arg1: i32) -> (i32, i32) {
    %c0_i32 = arith.constant 0 : i32
    %c0_i32_0 = arith.constant 0 : i32
    return %c0_i32, %arg1 : i32, i32
  }
  func.func @transform_2(%arg0: i32, %arg1: i32) -> (i32, i32) {
    %c0_i32 = arith.constant 0 : i32
    return %arg0, %arg1 : i32, i32
  }
}

</mosaic_0001>

<llo_original>
// kernel: se_block_forward.3
$region0: #{se_block_forward.3}
  #allocation0 [shape = 'u32[]', space=smem, size = 0x4, offset = 0x4, fixed_abs, tag = 'smem constant byte address 0x4 - core index']
  #allocation1 [shape = 'u32[72,128]{1,0:T(1,128)}', space=vmem, size = 0x9000, scoped, tag = 'internal scratch']
  %s0 = inlined_call_operand.vmem [shape: f32[64,1], index: 0, kind: input, shape index: {}]
  %s1 = inlined_call_operand.vmem [shape: f32[1,64], index: 1, kind: input, shape index: {}]
  %s2 = inlined_call_operand.vmem [shape: f32[64,64], index: 2, kind: output, shape index: {}]
  %s3 = sld [smem:[#allocation0]]
  $region18: #{se_block_forward.3} parent=0
    _
  %s5 = ssub.s32 1, %s3
  %s6 = scalar_select 0, %s5, %s3
  // Predicated region
  $region2: #{se_block_forward.3} parent=0 // pred_check
    _
  $region3: #{se_block_forward.3} parent=0 // pred_check_branch
    %8 = sbr.rel (0) target = $region5
  $region4: #{se_block_forward.3} parent=0 // pred_region
    _
  $region5: #{se_block_forward.3} parent=0 // pred_fallthru
    _
  // Predicated region
  $region6: #{se_block_forward.3} parent=0 // pred_check
    _
  $region7: #{se_block_forward.3} parent=0 // pred_check_branch
    %10 = sbr.rel (0) target = $region9
  $region8: #{se_block_forward.3} parent=0 // pred_region
    _
  $region9: #{se_block_forward.3} parent=0 // pred_fallthru
    _
  %v11 = vld [vmem:[%s0] sm:$0xff]
  %v12 = vld [vmem:[%s0 + $0x8] sm:$0xff]
  %v13 = vld [vmem:[%s0 + $0x10] sm:$0xff]
  %v14 = vld [vmem:[%s0 + $0x18] sm:$0xff]
  %v15 = vld [vmem:[%s0 + $0x20] sm:$0xff]
  %v16 = vld [vmem:[%s0 + $0x28] sm:$0xff]
  %v17 = vld [vmem:[%s0 + $0x30] sm:$0xff]
  %v18 = vld [vmem:[%s0 + $0x38] sm:$0xff]
  %v19 = vld [vmem:[%s1] sm:$0x1]
  %21 = vset.pattern.permute.xlu0 0
  %22 = vperm.xlu0 %21, %v11
  %v23 = vpop.permute.xlu0 %22
  %26 = vset.pattern.permute.xlu0 0
  %27 = vperm.xlu0 %26, %v12
  %v28 = vpop.permute.xlu0 %27
  %31 = vset.pattern.permute.xlu0 0
  %32 = vperm.xlu0 %31, %v13
  %v33 = vpop.permute.xlu0 %32
  %36 = vset.pattern.permute.xlu0 0
  %37 = vperm.xlu0 %36, %v14
  %v38 = vpop.permute.xlu0 %37
  %41 = vset.pattern.permute.xlu0 0
  %42 = vperm.xlu0 %41, %v15
  %v43 = vpop.permute.xlu0 %42
  %46 = vset.pattern.permute.xlu0 0
  %47 = vperm.xlu0 %46, %v16
  %v48 = vpop.permute.xlu0 %47
  %51 = vset.pattern.permute.xlu0 0
  %52 = vperm.xlu0 %51, %v17
  %v53 = vpop.permute.xlu0 %52
  %56 = vset.pattern.permute.xlu0 0
  %57 = vperm.xlu0 %56, %v18
  %v58 = vpop.permute.xlu0 %57
  %v61 = vperm.slane %v19, 0
  %v63 = vmul.f32 %v23, %v61
  %v64 = vmul.f32 %v28, %v61
  %v65 = vmul.f32 %v33, %v61
  %v66 = vmul.f32 %v38, %v61
  %v67 = vmul.f32 %v43, %v61
  %v68 = vmul.f32 %v48, %v61
  %v69 = vmul.f32 %v53, %v61
  %v70 = vmul.f32 %v58, %v61
  %vm71 = vcmask 523264
  %72 = vst.msk [vmem:[%s2] sm:$0xff] %vm71, %v63
  %73 = vst.msk [vmem:[%s2 + $0x8] sm:$0xff] %vm71, %v64
  %74 = vst.msk [vmem:[%s2 + $0x10] sm:$0xff] %vm71, %v65
  %75 = vst.msk [vmem:[%s2 + $0x18] sm:$0xff] %vm71, %v66
  %76 = vst.msk [vmem:[%s2 + $0x20] sm:$0xff] %vm71, %v67
  %77 = vst.msk [vmem:[%s2 + $0x28] sm:$0xff] %vm71, %v68
  %78 = vst.msk [vmem:[%s2 + $0x30] sm:$0xff] %vm71, %v69
  %79 = vst.msk [vmem:[%s2 + $0x38] sm:$0xff] %vm71, %v70
  // Predicated region
  $region10: #{se_block_forward.3} parent=0 // pred_check
    _
  $region11: #{se_block_forward.3} parent=0 // pred_check_branch
    %81 = sbr.rel (0) target = $region13
  $region12: #{se_block_forward.3} parent=0 // pred_region
    _
  $region13: #{se_block_forward.3} parent=0 // pred_fallthru
    _
  // Predicated region
  $region14: #{se_block_forward.3} parent=0 // pred_check
    _
  $region15: #{se_block_forward.3} parent=0 // pred_check_branch
    %83 = sbr.rel (0) target = $region17
  $region16: #{se_block_forward.3} parent=0 // pred_region
    _
  $region17: #{se_block_forward.3} parent=0 // pred_fallthru
    _

// kernel: se_block_forward.2
$region0: #{se_block_forward.2}
  #allocation0 [shape = 'u32[]', space=smem, size = 0x4, offset = 0x4, fixed_abs, tag = 'smem constant byte address 0x4 - core index']
  #allocation1 [shape = 'u32[72,128]{1,0:T(1,128)}', space=vmem, size = 0x9000, scoped, tag = 'internal scratch']
  #allocation2 [shape = 'f32[64,128]{1,0:T(8,128)}', space=vmem, size = 0x8000, scoped, tag = 'scratch operand']
  %s0 = inlined_call_operand.vmem [shape: f32[64,256], index: 0, kind: input, shape index: {}]
  %s1 = inlined_call_operand.vmem [shape: f32[32,2], index: 1, kind: input, shape index: {}]
  %s2 = inlined_call_operand.vmem [shape: f32[1,2], index: 2, kind: input, shape index: {}]
  %s3 = inlined_call_operand.vmem [shape: f32[32,2], index: 3, kind: input, shape index: {}]
  %s4 = inlined_call_operand.vmem [shape: f32[32,1], index: 4, kind: input, shape index: {}]
  %s5 = inlined_call_operand.vmem [shape: f32[64,1], index: 5, kind: output, shape index: {}]
  %s6 = sld [smem:[#allocation0]]
  $region38: #{se_block_forward.2} parent=0
    _
  %s8 = ssub.s32 1, %s6
  %s9 = scalar_select 0, %s8, %s6
  // Predicated region
  $region2: #{se_block_forward.2} parent=0 // pred_check
    _
  $region3: #{se_block_forward.2} parent=0 // pred_check_branch
    %11 = sbr.rel (0) target = $region5
  $region4: #{se_block_forward.2} parent=0 // pred_region
    _
  $region5: #{se_block_forward.2} parent=0 // pred_fallthru
    _
  // Predicated region
  $region6: #{se_block_forward.2} parent=0 // pred_check
    _
  $region7: #{se_block_forward.2} parent=0 // pred_check_branch
    %13 = sbr.rel (0) target = $region9
  $region8: #{se_block_forward.2} parent=0 // pred_region
    _
  $region9: #{se_block_forward.2} parent=0 // pred_fallthru
    _
  // Predicated region
  $region10: #{se_block_forward.2} parent=0 // pred_check
    _
  $region11: #{se_block_forward.2} parent=0 // pred_check_branch
    %15 = sbr.rel (0) target = $region13
  $region12: #{se_block_forward.2} parent=0 // pred_region
    _
  $region13: #{se_block_forward.2} parent=0 // pred_fallthru
    _
  // Predicated region
  $region14: #{se_block_forward.2} parent=0 // pred_check
    _
  $region15: #{se_block_forward.2} parent=0 // pred_check_branch
    %17 = sbr.rel (0) target = $region17
  $region16: #{se_block_forward.2} parent=0 // pred_region
    _
  $region17: #{se_block_forward.2} parent=0 // pred_fallthru
    _
  // Predicated region
  $region18: #{se_block_forward.2} parent=0 // pred_check
    _
  $region19: #{se_block_forward.2} parent=0 // pred_check_branch
    %19 = sbr.rel (0) target = $region21
  $region20: #{se_block_forward.2} parent=0 // pred_region
    _
  $region21: #{se_block_forward.2} parent=0 // pred_fallthru
    _
  %p20 = scmp.eq.s32.totalorder 0, 0
  // Predicated region
  $region22: #{se_block_forward.2} parent=0 // pred_check
    %p21 = pneg %p20
  $region23: #{se_block_forward.2} parent=0 // pred_check_branch
    %23 = sbr.rel (%p21) target = $region25
  $region24: #{se_block_forward.2} parent=0 // pred_region
    %24 = vst [vmem:[#allocation2] sm:$0xff] 0.0
    %25 = vst [vmem:[#allocation2 + $0x8] sm:$0xff] 0.0
    %26 = vst [vmem:[#allocation2 + $0x10] sm:$0xff] 0.0
    %27 = vst [vmem:[#allocation2 + $0x18] sm:$0xff] 0.0
    %28 = vst [vmem:[#allocation2 + $0x20] sm:$0xff] 0.0
    %29 = vst [vmem:[#allocation2 + $0x28] sm:$0xff] 0.0
    %30 = vst [vmem:[#allocation2 + $0x30] sm:$0xff] 0.0
    %31 = vst [vmem:[#allocation2 + $0x38] sm:$0xff] 0.0
  $region25: #{se_block_forward.2} parent=0 // pred_fallthru
    _
  %v32 = vld [vmem:[%s0] sm:$0xff]
  %v33 = vld [vmem:[%s0 + $0x8] sm:$0xff]
  %v34 = vld [vmem:[%s0 + $0x10] sm:$0xff]
  %v35 = vld [vmem:[%s0 + $0x18] sm:$0xff]
  %v36 = vld [vmem:[%s0 + $0x20] sm:$0xff]
  %v37 = vld [vmem:[%s0 + $0x28] sm:$0xff]
  %v38 = vld [vmem:[%s0 + $0x30] sm:$0xff]
  %v39 = vld [vmem:[%s0 + $0x38] sm:$0xff]
  %v40 = vld [vmem:[%s0 + $0x40] sm:$0xff]
  %v41 = vld [vmem:[%s0 + $0x48] sm:$0xff]
  %v42 = vld [vmem:[%s0 + $0x50] sm:$0xff]
  %v43 = vld [vmem:[%s0 + $0x58] sm:$0xff]
  %v44 = vld [vmem:[%s0 + $0x60] sm:$0xff]
  %v45 = vld [vmem:[%s0 + $0x68] sm:$0xff]
  %v46 = vld [vmem:[%s0 + $0x70] sm:$0xff]
  %v47 = vld [vmem:[%s0 + $0x78] sm:$0xff]
  %v48 = vadd.f32 %v32, %v33
  %v49 = vadd.f32 %v34, %v35
  %v50 = vadd.f32 %v36, %v37
  %v51 = vadd.f32 %v38, %v39
  %v52 = vadd.f32 %v40, %v41
  %v53 = vadd.f32 %v42, %v43
  %v54 = vadd.f32 %v44, %v45
  %v55 = vadd.f32 %v46, %v47
  %v56 = vld [vmem:[#allocation2] sm:$0xff]
  %v57 = vld [vmem:[#allocation2 + $0x8] sm:$0xff]
  %v58 = vld [vmem:[#allocation2 + $0x10] sm:$0xff]
  %v59 = vld [vmem:[#allocation2 + $0x18] sm:$0xff]
  %v60 = vld [vmem:[#allocation2 + $0x20] sm:$0xff]
  %v61 = vld [vmem:[#allocation2 + $0x28] sm:$0xff]
  %v62 = vld [vmem:[#allocation2 + $0x30] sm:$0xff]
  %v63 = vld [vmem:[#allocation2 + $0x38] sm:$0xff]
  %v64 = vadd.f32 %v56, %v48
  %v65 = vadd.f32 %v57, %v49
  %v66 = vadd.f32 %v58, %v50
  %v67 = vadd.f32 %v59, %v51
  %v68 = vadd.f32 %v60, %v52
  %v69 = vadd.f32 %v61, %v53
  %v70 = vadd.f32 %v62, %v54
  %v71 = vadd.f32 %v63, %v55
  %72 = vst [vmem:[#allocation2] sm:$0xff] %v64
  %73 = vst [vmem:[#allocation2 + $0x8] sm:$0xff] %v65
  %74 = vst [vmem:[#allocation2 + $0x10] sm:$0xff] %v66
  %75 = vst [vmem:[#allocation2 + $0x18] sm:$0xff] %v67
  %76 = vst [vmem:[#allocation2 + $0x20] sm:$0xff] %v68
  %77 = vst [vmem:[#allocation2 + $0x28] sm:$0xff] %v69
  %78 = vst [vmem:[#allocation2 + $0x30] sm:$0xff] %v70
  %79 = vst [vmem:[#allocation2 + $0x38] sm:$0xff] %v71
  // Predicated region
  $region26: #{se_block_forward.2} parent=0 // pred_check
    %p80 = pneg %p20
  $region27: #{se_block_forward.2} parent=0 // pred_check_branch
    %82 = sbr.rel (%p80) target = $region29
  $region28: #{se_block_forward.2} parent=0 // pred_region
    %v83 = vld [vmem:[#allocation2] sm:$0xff]
    %v84 = vld [vmem:[#allocation2 + $0x8] sm:$0xff]
    %v85 = vld [vmem:[#allocation2 + $0x10] sm:$0xff]
    %v86 = vld [vmem:[#allocation2 + $0x18] sm:$0xff]
    %v87 = vld [vmem:[#allocation2 + $0x20] sm:$0xff]
    %v88 = vld [vmem:[#allocation2 + $0x28] sm:$0xff]
    %v89 = vld [vmem:[#allocation2 + $0x30] sm:$0xff]
    %v90 = vld [vmem:[#allocation2 + $0x38] sm:$0xff]
    %91 = vadd.xlane.f32.xlu0 %v83
    %v92 = vpop.xlane.xlu0 %91
    %93 = vadd.xlane.f32.xlu0 %v84
    %v94 = vpop.xlane.xlu0 %93
    %95 = vadd.xlane.f32.xlu0 %v85
    %v96 = vpop.xlane.xlu0 %95
    %97 = vadd.xlane.f32.xlu0 %v86
    %v98 = vpop.xlane.xlu0 %97
    %99 = vadd.xlane.f32.xlu0 %v87
    %v100 = vpop.xlane.xlu0 %99
    %101 = vadd.xlane.f32.xlu0 %v88
    %v102 = vpop.xlane.xlu0 %101
    %103 = vadd.xlane.f32.xlu0 %v89
    %v104 = vpop.xlane.xlu0 %103
    %105 = vadd.xlane.f32.xlu0 %v90
    %v106 = vpop.xlane.xlu0 %105
    %v107 = vmul.f32 %v92, 0.00390625
    %v108 = vmul.f32 %v94, 0.00390625
    %v109 = vmul.f32 %v96, 0.00390625
    %v110 = vmul.f32 %v98, 0.00390625
    %v111 = vmul.f32 %v100, 0.00390625
    %v112 = vmul.f32 %v102, 0.00390625
    %v113 = vmul.f32 %v104, 0.00390625
    %v114 = vmul.f32 %v106, 0.00390625
    %v115 = vld [vmem:[%s1] sm:$0xff]
    %v116 = vld [vmem:[%s1 + $0x8] sm:$0xff]
    %v117 = vld [vmem:[%s1 + $0x10] sm:$0xff]
    %v118 = vld [vmem:[%s1 + $0x18] sm:$0xff]
    %v119 = vld [vmem:[%s2] sm:$0x1]
    %v120 = vld [vmem:[%s3] sm:$0xff]
    %v121 = vld [vmem:[%s3 + $0x8] sm:$0xff]
    %v122 = vld [vmem:[%s3 + $0x10] sm:$0xff]
    %v123 = vld [vmem:[%s3 + $0x18] sm:$0xff]
    %v124 = vld [vmem:[%s4] sm:$0xff]
    %v125 = vld [vmem:[%s4 + $0x8] sm:$0xff]
    %v126 = vld [vmem:[%s4 + $0x10] sm:$0xff]
    %v127 = vld [vmem:[%s4 + $0x18] sm:$0xff]
    %v128 = vmul.f32 %v107, %v115
    %v129 = vmul.f32 %v108, %v116
    %v130 = vmul.f32 %v109, %v117
    %v131 = vmul.f32 %v110, %v118
    %vm132 = vcmask 15360
    %v133 = vsel %vm132, %v128, 0.0
    %v134 = vsel %vm132, %v129, 0.0
    %v135 = vadd.f32 %v133, %v134
    %v136 = vsel %vm132, %v130, 0.0
    %v137 = vadd.f32 %v135, %v136
    %v138 = vsel %vm132, %v131, 0.0
    %v139 = vadd.f32 %v137, %v138
    %v140 = vrot.slane %v139, 4
    %v141 = vadd.f32 %v139, %v140
    %v142 = vrot.slane %v141, 2
    %v143 = vadd.f32 %v141, %v142
    %v144 = vrot.slane %v143, 1
    %v145 = vadd.f32 %v143, %v144
    %v146 = vadd.f32 %v145, %v119
    %v147 = vmax.f32 %v146, 0.0
    %v148 = vperm.slane %v147, 0
    %v149 = vmul.f32 %v148, %v120
    %v150 = vmul.f32 %v148, %v121
    %v151 = vmul.f32 %v148, %v122
    %v152 = vmul.f32 %v148, %v123
    %v153 = vsel %vm132, %v149, 0.0
    %154 = vadd.xlane.f32.xlu0 %v153
    %v155 = vpop.xlane.xlu0 %154
    %v156 = vsel %vm132, %v150, 0.0
    %157 = vadd.xlane.f32.xlu0 %v156
    %v158 = vpop.xlane.xlu0 %157
    %v159 = vsel %vm132, %v151, 0.0
    %160 = vadd.xlane.f32.xlu0 %v159
    %v161 = vpop.xlane.xlu0 %160
    %v162 = vsel %vm132, %v152, 0.0
    %163 = vadd.xlane.f32.xlu0 %v162
    %v164 = vpop.xlane.xlu0 %163
    %v165 = vadd.f32 %v155, %v124
    %v166 = vadd.f32 %v158, %v125
    %v167 = vadd.f32 %v161, %v126
    %v168 = vadd.f32 %v164, %v127
    %v169 = vand.u32 2147483647, %v165
    %v170 = vand.u32 2147483647, %v166
    %v171 = vand.u32 2147483647, %v167
    %v172 = vand.u32 2147483647, %v168
    %v173 = vsub.f32 0.0, %v169
    %v174 = vsub.f32 0.0, %v170
    %v175 = vsub.f32 0.0, %v171
    %v176 = vsub.f32 0.0, %v172
    %v177 = vmul.f32 %v173, 1.442695
    %v178 = vpow.pop %v177
    %v179 = vmul.f32 %v174, 1.442695
    %v180 = vpow.pop %v179
    %v181 = vmul.f32 %v175, 1.442695
    %v182 = vpow.pop %v181
    %v183 = vmul.f32 %v176, 1.442695
    %v184 = vpow.pop %v183
    %vm185 = vcmp.ge.f32.partialorder %v165, 0.0
    %vm186 = vcmp.ge.f32.partialorder %v166, 0.0
    %vm187 = vcmp.ge.f32.partialorder %v167, 0.0
    %vm188 = vcmp.ge.f32.partialorder %v168, 0.0
    %v189 = vadd.f32 %v178, 1.0
    %v190 = vadd.f32 %v180, 1.0
    %v191 = vadd.f32 %v182, 1.0
    %v192 = vadd.f32 %v184, 1.0
    %v193 = vrcp.pop %v189
    %v194 = vmul.f32 %v189, %v193
    %v195 = vsub.f32 1.0, %v194
    %v196 = vmul.f32 %v193, %v195
    %v197 = vadd.f32 %v193, %v196
    %vm198 = vweird.f32 %v189
    %vm199 = vweird.f32 %v193
    %vm200 = vmor %vm198, %vm199
    %v201 = vsel %vm200, %v193, %v197
    %v202 = vand.u32 2147483647, %v189
    %vm203 = vcmp.eq.f32.partialorder %v202, 8.507059e+37
    %v204 = vand.u32 %v189, 2147483648
    %v205 = vor.u32 1.1754944e-38, %v204
    %v206 = vsel %vm203, %v205, %v201
    %v207 = vmul.f32 1.0, %v206
    %v208 = vrcp.pop %v190
    %v209 = vmul.f32 %v190, %v208
    %v210 = vsub.f32 1.0, %v209
    %v211 = vmul.f32 %v208, %v210
    %v212 = vadd.f32 %v208, %v211
    %vm213 = vweird.f32 %v190
    %vm214 = vweird.f32 %v208
    %vm215 = vmor %vm213, %vm214
    %v216 = vsel %vm215, %v208, %v212
    %v217 = vand.u32 2147483647, %v190
    %vm218 = vcmp.eq.f32.partialorder %v217, 8.507059e+37
    %v219 = vand.u32 %v190, 2147483648
    %v220 = vor.u32 1.1754944e-38, %v219
    %v221 = vsel %vm218, %v220, %v216
    %v222 = vmul.f32 1.0, %v221
    %v223 = vrcp.pop %v191
    %v224 = vmul.f32 %v191, %v223
    %v225 = vsub.f32 1.0, %v224
    %v226 = vmul.f32 %v223, %v225
    %v227 = vadd.f32 %v223, %v226
    %vm228 = vweird.f32 %v191
    %vm229 = vweird.f32 %v223
    %vm230 = vmor %vm228, %vm229
    %v231 = vsel %vm230, %v223, %v227
    %v232 = vand.u32 2147483647, %v191
    %vm233 = vcmp.eq.f32.partialorder %v232, 8.507059e+37
    %v234 = vand.u32 %v191, 2147483648
    %v235 = vor.u32 1.1754944e-38, %v234
    %v236 = vsel %vm233, %v235, %v231
    %v237 = vmul.f32 1.0, %v236
    %v238 = vrcp.pop %v192
    %v239 = vmul.f32 %v192, %v238
    %v240 = vsub.f32 1.0, %v239
    %v241 = vmul.f32 %v238, %v240
    %v242 = vadd.f32 %v238, %v241
    %vm243 = vweird.f32 %v192
    %vm244 = vweird.f32 %v238
    %vm245 = vmor %vm243, %vm244
    %v246 = vsel %vm245, %v238, %v242
    %v247 = vand.u32 2147483647, %v192
    %vm248 = vcmp.eq.f32.partialorder %v247, 8.507059e+37
    %v249 = vand.u32 %v192, 2147483648
    %v250 = vor.u32 1.1754944e-38, %v249
    %v251 = vsel %vm248, %v250, %v246
    %v252 = vmul.f32 1.0, %v251
    %v253 = vmul.f32 %v178, %v206
    %v254 = vmul.f32 %v180, %v221
    %v255 = vmul.f32 %v182, %v236
    %v256 = vmul.f32 %v184, %v251
    %v257 = vsel %vm185, %v207, %v253
    %v258 = vsel %vm186, %v222, %v254
    %v259 = vsel %vm187, %v237, %v255
    %v260 = vsel %vm188, %v252, %v256
    %vm261 = vcmask 7168
    %262 = vst.msk [vmem:[%s5] sm:$0xff] %vm261, %v257
    %263 = vst.msk [vmem:[%s5 + $0x8] sm:$0xff] %vm261, %v258
    %264 = vst.msk [vmem:[%s5 + $0x10] sm:$0xff] %vm261, %v259
    %265 = vst.msk [vmem:[%s5 + $0x18] sm:$0xff] %vm261, %v260
    %v266 = vmul.f32 %v111, %v115
    %v267 = vmul.f32 %v112, %v116
    %v268 = vmul.f32 %v113, %v117
    %v269 = vmul.f32 %v114, %v118
    %v270 = vsel %vm132, %v266, 0.0
    %v271 = vsel %vm132, %v267, 0.0
    %v272 = vadd.f32 %v270, %v271
    %v273 = vsel %vm132, %v268, 0.0
    %v274 = vadd.f32 %v272, %v273
    %v275 = vsel %vm132, %v269, 0.0
    %v276 = vadd.f32 %v274, %v275
    %v277 = vrot.slane %v276, 4
    %v278 = vadd.f32 %v276, %v277
    %v279 = vrot.slane %v278, 2
    %v280 = vadd.f32 %v278, %v279
    %v281 = vrot.slane %v280, 1
    %v282 = vadd.f32 %v280, %v281
    %v283 = vadd.f32 %v282, %v119
    %v284 = vmax.f32 %v283, 0.0
    %v285 = vperm.slane %v284, 0
    %v286 = vmul.f32 %v285, %v120
    %v287 = vmul.f32 %v285, %v121
    %v288 = vmul.f32 %v285, %v122
    %v289 = vmul.f32 %v285, %v123
    %v290 = vsel %vm132, %v286, 0.0
    %291 = vadd.xlane.f32.xlu0 %v290
    %v292 = vpop.xlane.xlu0 %291
    %v293 = vsel %vm132, %v287, 0.0
    %294 = vadd.xlane.f32.xlu0 %v293
    %v295 = vpop.xlane.xlu0 %294
    %v296 = vsel %vm132, %v288, 0.0
    %297 = vadd.xlane.f32.xlu0 %v296
    %v298 = vpop.xlane.xlu0 %297
    %v299 = vsel %vm132, %v289, 0.0
    %300 = vadd.xlane.f32.xlu0 %v299
    %v301 = vpop.xlane.xlu0 %300
    %v302 = vadd.f32 %v292, %v124
    %v303 = vadd.f32 %v295, %v125
    %v304 = vadd.f32 %v298, %v126
    %v305 = vadd.f32 %v301, %v127
    %v306 = vand.u32 2147483647, %v302
    %v307 = vand.u32 2147483647, %v303
    %v308 = vand.u32 2147483647, %v304
    %v309 = vand.u32 2147483647, %v305
    %v310 = vsub.f32 0.0, %v306
    %v311 = vsub.f32 0.0, %v307
    %v312 = vsub.f32 0.0, %v308
    %v313 = vsub.f32 0.0, %v309
    %v314 = vmul.f32 %v310, 1.442695
    %v315 = vpow.pop %v314
    %v316 = vmul.f32 %v311, 1.442695
    %v317 = vpow.pop %v316
    %v318 = vmul.f32 %v312, 1.442695
    %v319 = vpow.pop %v318
    %v320 = vmul.f32 %v313, 1.442695
    %v321 = vpow.pop %v320
    %vm322 = vcmp.ge.f32.partialorder %v302, 0.0
    %vm323 = vcmp.ge.f32.partialorder %v303, 0.0
    %vm324 = vcmp.ge.f32.partialorder %v304, 0.0
    %vm325 = vcmp.ge.f32.partialorder %v305, 0.0
    %v326 = vadd.f32 %v315, 1.0
    %v327 = vadd.f32 %v317, 1.0
    %v328 = vadd.f32 %v319, 1.0
    %v329 = vadd.f32 %v321, 1.0
    %v330 = vrcp.pop %v326
    %v331 = vmul.f32 %v326, %v330
    %v332 = vsub.f32 1.0, %v331
    %v333 = vmul.f32 %v330, %v332
    %v334 = vadd.f32 %v330, %v333
    %vm335 = vweird.f32 %v326
    %vm336 = vweird.f32 %v330
    %vm337 = vmor %vm335, %vm336
    %v338 = vsel %vm337, %v330, %v334
    %v339 = vand.u32 2147483647, %v326
    %vm340 = vcmp.eq.f32.partialorder %v339, 8.507059e+37
    %v341 = vand.u32 %v326, 2147483648
    %v342 = vor.u32 1.1754944e-38, %v341
    %v343 = vsel %vm340, %v342, %v338
    %v344 = vmul.f32 1.0, %v343
    %v345 = vrcp.pop %v327
    %v346 = vmul.f32 %v327, %v345
    %v347 = vsub.f32 1.0, %v346
    %v348 = vmul.f32 %v345, %v347
    %v349 = vadd.f32 %v345, %v348
    %vm350 = vweird.f32 %v327
    %vm351 = vweird.f32 %v345
    %vm352 = vmor %vm350, %vm351
    %v353 = vsel %vm352, %v345, %v349
    %v354 = vand.u32 2147483647, %v327
    %vm355 = vcmp.eq.f32.partialorder %v354, 8.507059e+37
    %v356 = vand.u32 %v327, 2147483648
    %v357 = vor.u32 1.1754944e-38, %v356
    %v358 = vsel %vm355, %v357, %v353
    %v359 = vmul.f32 1.0, %v358
    %v360 = vrcp.pop %v328
    %v361 = vmul.f32 %v328, %v360
    %v362 = vsub.f32 1.0, %v361
    %v363 = vmul.f32 %v360, %v362
    %v364 = vadd.f32 %v360, %v363
    %vm365 = vweird.f32 %v328
    %vm366 = vweird.f32 %v360
    %vm367 = vmor %vm365, %vm366
    %v368 = vsel %vm367, %v360, %v364
    %v369 = vand.u32 2147483647, %v328
    %vm370 = vcmp.eq.f32.partialorder %v369, 8.507059e+37
    %v371 = vand.u32 %v328, 2147483648
    %v372 = vor.u32 1.1754944e-38, %v371
    %v373 = vsel %vm370, %v372, %v368
    %v374 = vmul.f32 1.0, %v373
    %v375 = vrcp.pop %v329
    %v376 = vmul.f32 %v329, %v375
    %v377 = vsub.f32 1.0, %v376
    %v378 = vmul.f32 %v375, %v377
    %v379 = vadd.f32 %v375, %v378
    %vm380 = vweird.f32 %v329
    %vm381 = vweird.f32 %v375
    %vm382 = vmor %vm380, %vm381
    %v383 = vsel %vm382, %v375, %v379
    %v384 = vand.u32 2147483647, %v329
    %vm385 = vcmp.eq.f32.partialorder %v384, 8.507059e+37
    %v386 = vand.u32 %v329, 2147483648
    %v387 = vor.u32 1.1754944e-38, %v386
    %v388 = vsel %vm385, %v387, %v383
    %v389 = vmul.f32 1.0, %v388
    %v390 = vmul.f32 %v315, %v343
    %v391 = vmul.f32 %v317, %v358
    %v392 = vmul.f32 %v319, %v373
    %v393 = vmul.f32 %v321, %v388
    %v394 = vsel %vm322, %v344, %v390
    %v395 = vsel %vm323, %v359, %v391
    %v396 = vsel %vm324, %v374, %v392
    %v397 = vsel %vm325, %v389, %v393
    %398 = vst.msk [vmem:[%s5 + $0x20] sm:$0xff] %vm261, %v394
    %399 = vst.msk [vmem:[%s5 + $0x28] sm:$0xff] %vm261, %v395
    %400 = vst.msk [vmem:[%s5 + $0x30] sm:$0xff] %vm261, %v396
    %401 = vst.msk [vmem:[%s5 + $0x38] sm:$0xff] %vm261, %v397
  $region29: #{se_block_forward.2} parent=0 // pred_fallthru
    _
  // Predicated region
  $region30: #{se_block_forward.2} parent=0 // pred_check
    _
  $region31: #{se_block_forward.2} parent=0 // pred_check_branch
    %403 = sbr.rel (0) target = $region33
  $region32: #{se_block_forward.2} parent=0 // pred_region
    _
  $region33: #{se_block_forward.2} parent=0 // pred_fallthru
    _
  // Predicated region
  $region34: #{se_block_forward.2} parent=0 // pred_check
    _
  $region35: #{se_block_forward.2} parent=0 // pred_check_branch
    %405 = sbr.rel (0) target = $region37
  $region36: #{se_block_forward.2} parent=0 // pred_region
    _
  $region37: #{se_block_forward.2} parent=0 // pred_fallthru
    _

</llo_original>
